<compile_context>
chip_gen: v6e
topology: v6e:2x2x1
jax: 0.10.0
libtpu: 0.0.40
codegen_flags: <defaults>
</compile_context>

<pallas_src>
import jax
import jax.numpy as jnp
from jax.experimental import pallas as pl
from jax.experimental.pallas import tpu as pltpu

LN_EPS = 1e-5


def _round_up(x, m):
    return ((x + m - 1) // m) * m


def _num_tensorcores_per_chip():
    """How many TensorCores share this chip's grid under "parallel" semantics."""
    try:
        kind = jax.devices()[0].device_kind.lower().replace(" ", "")
    except Exception:
        return 1
    return 2 if any(m in kind for m in ("v7", "v4", "v5p")) else 1


def _layernorm(x, gamma, beta):
    # x: (TM, H) f32, gamma/beta: (1, H) f32
    mean = jnp.mean(x, axis=-1, keepdims=True)
    xc = x - mean
    var = jnp.mean(xc * xc, axis=-1, keepdims=True)
    inv = jax.lax.rsqrt(var + LN_EPS)          # EUP rsqrt (free slot)
    return xc * inv * gamma + beta


def motion_mlp_kernel(
    xf_ref,    # (TM, C)       feature part of the input rows
    xl_ref,    # (TM, 2)       location part of the input rows
    w1f_ref,   # (C, H)        first-linear weight, feature rows
    w1l_ref,   # (2, H)        first-linear weight, location rows
    vec_ref,   # (6, H)        packed b1, g1, be1, b2, g2, be2
    w2_ref,    # (H, H)
    w3_ref,    # (H, DOUT)
    b3_ref,    # (1, DOUT)
    o_ref,     # (TM, DOUT)
):
    # Only the tiny per-feature rows are hoisted into values; the big weight
    # tiles stream straight from their VMEM refs into the MXU (keeps vreg /
    # spill pressure low at large row tiles).
    b1 = vec_ref[0:1, :].astype(jnp.float32)
    g1 = vec_ref[1:2, :].astype(jnp.float32)
    be1 = vec_ref[2:3, :].astype(jnp.float32)
    b2 = vec_ref[3:4, :].astype(jnp.float32)
    g2 = vec_ref[4:5, :].astype(jnp.float32)
    be2 = vec_ref[5:6, :].astype(jnp.float32)

    # ---- Linear 1 + LN + ReLU ---------------------------------------------
    # cat([feat, loc]) @ w1 == feat @ w1[:C] + loc @ w1[C:], so the concat
    # never touches HBM and the loc contribution is a tiny K=2 MXU dot
    # instead of VPU outer products (VALU is the saturated slot here).
    h = jnp.dot(xf_ref[...], w1f_ref[...], preferred_element_type=jnp.float32)
    h = h + jnp.dot(xl_ref[...], w1l_ref[...],
                    preferred_element_type=jnp.float32)
    h = h + b1
    h = jnp.maximum(_layernorm(h, g1, be1), 0.0)

    # ---- Linear 2 + LN + ReLU ---------------------------------------------
    h = jnp.dot(h, w2_ref[...], preferred_element_type=jnp.float32) + b2
    h = jnp.maximum(_layernorm(h, g2, be2), 0.0)

    # ---- Output head: last dim = horizon*2 directly (masked stores) --------
    out = jnp.dot(h, w3_ref[...], preferred_element_type=jnp.float32)
    out = out + b3_ref[...].astype(jnp.float32)
    o_ref[...] = out.astype(o_ref.dtype)


def pack_params(params, in_channels):
    """One-time parameter packing (hoisted out of the per-call path)."""
    w1, b1, g1, be1, w2, b2, g2, be2, w3, b3 = params
    w1f = w1[:in_channels]                                        # (C, H)
    w1l = w1[in_channels:]                                        # (2, H)
    vecs = jnp.concatenate([b1, g1, be1, b2, g2, be2], axis=0)    # (6, H)
    return (w1f, w1l, vecs, w2, w3, b3)


def _choose_row_tile(M, row_tile, n_cores):
    # Balanced tiles: padded/junk work is bounded by <1 tile regardless of M,
    # and on 2-TC chips the number of grid steps stays a multiple of n_cores
    # so both TensorCores get work from the "parallel" grid axis.
    n_tiles = _round_up(max(n_cores, pl.cdiv(M, row_tile)), n_cores)
    rt = _round_up(max(1, pl.cdiv(M, n_tiles)), 8)
    return max(8, min(rt, _round_up(M, 8)))


def motion_estimation_forward(feat_in, loc_in, packed_params, *, row_tile=1024):
    """feat_in: (B, N, C), loc_in: (B, N, 2) -> (B, N, horizon*2)."""
    B, N, C = feat_in.shape
    M = B * N
    xf = feat_in.reshape(M, C)
    xl = loc_in.reshape(M, 2)

    w1f, w1l, vecs, w2, w3, b3 = packed_params
    H = w1f.shape[1]
    dout = w3.shape[1]

    rt = _choose_row_tile(M, row_tile, _num_tensorcores_per_chip())
    # Ragged last block (if M % rt != 0) is read-padded / write-masked by
    # Pallas, so no wrapper-side jnp.pad of the inputs and no post-call slice.
    grid = (pl.cdiv(M, rt),)

    full = lambda shape: pl.BlockSpec(shape, lambda i: (0, 0))
    # NOTE: if hidden_dim is ever scaled to >=1024 on v7x (64 MiB VMEM), mark
    # the constant weight blocks below with pipeline_mode=pl.Buffered(1)
    # and/or set vmem_limit_bytes; unnecessary at hidden_dim=64.

    out2d = pl.pallas_call(
        motion_mlp_kernel,
        out_shape=jax.ShapeDtypeStruct((M, dout), feat_in.dtype),
        grid_spec=pltpu.PrefetchScalarGridSpec(
            num_scalar_prefetch=0,
            grid=grid,
            in_specs=[
                pl.BlockSpec((rt, C), lambda i: (i, 0)),   # feat rows
                pl.BlockSpec((rt, 2), lambda i: (i, 0)),   # loc rows
                full((C, H)),           # w1 (feature rows)
                full((2, H)),           # w1 (location rows)
                full((6, H)),           # packed b1,g1,be1,b2,g2,be2
                full((H, H)),           # w2
                full((H, dout)),        # w3
                full((1, dout)),        # b3
            ],
            out_specs=pl.BlockSpec((rt, dout), lambda i: (i, 0)),
        ),
        compiler_params=pltpu.CompilerParams(
            dimension_semantics=("parallel",)),
    )(xf, xl, w1f, w1l, vecs, w2, w3, b3)

    return out2d.reshape(B, N, dout)


def init_params(key, in_channels, horizon, hidden_dim):
    """Deterministic synthetic parameters matching the PyTorch module shapes.
    Linear weights are stored transposed vs. torch (i.e. (in, out))."""
    din = in_channels + 2
    dout = horizon * 2
    ks = jax.random.split(key, 6)

    def lin(kw, kb, fan_in, fan_out):
        bound = 1.0 / jnp.sqrt(fan_in)
        w = jax.random.uniform(kw, (fan_in, fan_out), jnp.float32, -bound, bound)
        b = jax.random.uniform(kb, (1, fan_out), jnp.float32, -bound, bound)
        return w, b

    w1, b1 = lin(ks[0], ks[1], din, hidden_dim)
    w2, b2 = lin(ks[2], ks[3], hidden_dim, hidden_dim)
    w3, b3 = lin(ks[4], ks[5], hidden_dim, dout)
    g1 = jnp.ones((1, hidden_dim), jnp.float32)
    be1 = jnp.zeros((1, hidden_dim), jnp.float32)
    g2 = jnp.ones((1, hidden_dim), jnp.float32)
    be2 = jnp.zeros((1, hidden_dim), jnp.float32)
    return (w1, b1, g1, be1, w2, b2, g2, be2, w3, b3)


def reference_forward(feat_in, loc_in, params):
    """Pure-JAX reference mirroring the PyTorch semantics."""
    w1, b1, g1, be1, w2, b2, g2, be2, w3, b3 = params
    x = jnp.concatenate([feat_in, loc_in], axis=2)

    def ln(h, g, b):
        m = jnp.mean(h, axis=-1, keepdims=True)
        v = jnp.mean((h - m) ** 2, axis=-1, keepdims=True)
        return (h - m) / jnp.sqrt(v + LN_EPS) * g + b

    h = jnp.maximum(ln(x @ w1 + b1, g1, be1), 0.0)
    h = jnp.maximum(ln(h @ w2 + b2, g2, be2), 0.0)
    return h @ w3 + b3


if __name__ == "__main__":
    # Small shapes consistent with the module's forward:
    #   feat_in: (B, N, in_channels), loc_in: (B, N, 2)
    B, N = 2, 8
    in_channels = 30          # so in_channels + 2 = 32
    horizon = 30              # module default -> output dim = 60
    hidden_dim = 64           # module default

    key = jax.random.PRNGKey(0)
    k_feat, k_loc, k_par = jax.random.split(key, 3)
    feat_in = jax.random.normal(k_feat, (B, N, in_channels), jnp.float32)
    loc_in = jax.random.normal(k_loc, (B, N, 2), jnp.float32)
    params = init_params(k_par, in_channels, horizon, hidden_dim)
    packed = pack_params(params, in_channels)     # one-time parameter packing

    out = motion_estimation_forward(feat_in, loc_in, packed)
    out = jax.block_until_ready(out)

    ref = reference_forward(feat_in, loc_in, params)
    assert out.shape == (B, N, horizon * 2)
    err = jnp.max(jnp.abs(out - ref))
    assert jnp.allclose(out, ref, atol=1e-4, rtol=1e-4), f"max err {err}"

    print("KERNEL_OK")
</pallas_src>

<mosaic_0001>
module attributes {stable_mosaic.version = 11 : i64} {
  func.func @motion_mlp_kernel(%arg0: i32, %arg1: memref<16x30xf32, #tpu.memory_space<vmem>>, %arg2: memref<16x2xf32, #tpu.memory_space<vmem>>, %arg3: memref<30x64xf32, #tpu.memory_space<vmem>>, %arg4: memref<2x64xf32, #tpu.memory_space<vmem>>, %arg5: memref<6x64xf32, #tpu.memory_space<vmem>>, %arg6: memref<64x64xf32, #tpu.memory_space<vmem>>, %arg7: memref<64x60xf32, #tpu.memory_space<vmem>>, %arg8: memref<1x60xf32, #tpu.memory_space<vmem>>, %arg9: memref<16x60xf32, #tpu.memory_space<vmem>>) attributes {dimension_semantics = [#tpu.dimension_semantics<parallel>], iteration_bounds = array<i64: 1>, scalar_prefetch = 0 : i64, scratch_operands = 0 : i64, tpu.core_type = #tpu.core_type<tc>, window_params = [{transform_indices = @transform_0, window_bounds = array<i64: 16, 30>}, {transform_indices = @transform_1, window_bounds = array<i64: 16, 2>}, {pipeline_mode = #tpu.pipeline_mode<synchronous>, transform_indices = @transform_2, window_bounds = array<i64: 30, 64>}, {pipeline_mode = #tpu.pipeline_mode<synchronous>, transform_indices = @transform_3, window_bounds = array<i64: 2, 64>}, {pipeline_mode = #tpu.pipeline_mode<synchronous>, transform_indices = @transform_4, window_bounds = array<i64: 6, 64>}, {pipeline_mode = #tpu.pipeline_mode<synchronous>, transform_indices = @transform_5, window_bounds = array<i64: 64, 64>}, {pipeline_mode = #tpu.pipeline_mode<synchronous>, transform_indices = @transform_6, window_bounds = array<i64: 64, 60>}, {pipeline_mode = #tpu.pipeline_mode<synchronous>, transform_indices = @transform_7, window_bounds = array<i64: 1, 60>}, {transform_indices = @transform_8, window_bounds = array<i64: 16, 60>}]} {
    %c0 = arith.constant 0 : index
    %c0_0 = arith.constant 0 : index
    %0 = vector.load %arg5[%c0, %c0_0] : memref<6x64xf32, #tpu.memory_space<vmem>>, vector<1x64xf32>
    %c1 = arith.constant 1 : index
    %c0_1 = arith.constant 0 : index
    %1 = vector.load %arg5[%c1, %c0_1] : memref<6x64xf32, #tpu.memory_space<vmem>>, vector<1x64xf32>
    %c2 = arith.constant 2 : index
    %c0_2 = arith.constant 0 : index
    %2 = vector.load %arg5[%c2, %c0_2] : memref<6x64xf32, #tpu.memory_space<vmem>>, vector<1x64xf32>
    %c3 = arith.constant 3 : index
    %c0_3 = arith.constant 0 : index
    %3 = vector.load %arg5[%c3, %c0_3] : memref<6x64xf32, #tpu.memory_space<vmem>>, vector<1x64xf32>
    %c4 = arith.constant 4 : index
    %c0_4 = arith.constant 0 : index
    %4 = vector.load %arg5[%c4, %c0_4] : memref<6x64xf32, #tpu.memory_space<vmem>>, vector<1x64xf32>
    %c5 = arith.constant 5 : index
    %c0_5 = arith.constant 0 : index
    %5 = vector.load %arg5[%c5, %c0_5] : memref<6x64xf32, #tpu.memory_space<vmem>>, vector<1x64xf32>
    %c0_6 = arith.constant 0 : index
    %c0_7 = arith.constant 0 : index
    %6 = vector.load %arg1[%c0_6, %c0_7] : memref<16x30xf32, #tpu.memory_space<vmem>>, vector<16x30xf32>
    %c0_8 = arith.constant 0 : index
    %c0_9 = arith.constant 0 : index
    %7 = vector.load %arg3[%c0_8, %c0_9] : memref<30x64xf32, #tpu.memory_space<vmem>>, vector<30x64xf32>
    %cst = arith.constant dense<0.000000e+00> : vector<16x64xf32>
    %8 = tpu.matmul %6, %7, %cst {dimension_numbers = #tpu.dot_dimension_numbers<[1], [0], [0], [1], [0, 0, 1, 1], [], []>} : vector<16x30xf32>, vector<30x64xf32>, vector<16x64xf32> -> vector<16x64xf32>
    %c0_10 = arith.constant 0 : index
    %c0_11 = arith.constant 0 : index
    %9 = vector.load %arg2[%c0_10, %c0_11] : memref<16x2xf32, #tpu.memory_space<vmem>>, vector<16x2xf32>
    %c0_12 = arith.constant 0 : index
    %c0_13 = arith.constant 0 : index
    %10 = vector.load %arg4[%c0_12, %c0_13] : memref<2x64xf32, #tpu.memory_space<vmem>>, vector<2x64xf32>
    %cst_14 = arith.constant dense<0.000000e+00> : vector<16x64xf32>
    %11 = tpu.matmul %9, %10, %cst_14 {dimension_numbers = #tpu.dot_dimension_numbers<[1], [0], [0], [1], [0, 0, 1, 1], [], []>} : vector<16x2xf32>, vector<2x64xf32>, vector<16x64xf32> -> vector<16x64xf32>
    %12 = arith.addf %8, %11 : vector<16x64xf32>
    %13 = vector.broadcast %0 : vector<1x64xf32> to vector<16x64xf32>
    %14 = arith.addf %12, %13 : vector<16x64xf32>
    %cst_15 = arith.constant dense<0.000000e+00> : vector<16xf32>
    %15 = vector.multi_reduction <add>, %14, %cst_15 [1] : vector<16x64xf32> to vector<16xf32>
    %16 = vector.shape_cast %15 : vector<16xf32> to vector<16x1xf32>
    %cst_16 = arith.constant 6.400000e+01 : f32
    %17 = vector.broadcast %cst_16 : f32 to vector<16x1xf32>
    %18 = arith.divf %16, %17 : vector<16x1xf32>
    %19 = vector.broadcast %18 : vector<16x1xf32> to vector<16x64xf32>
    %20 = arith.subf %14, %19 : vector<16x64xf32>
    %21 = arith.mulf %20, %20 : vector<16x64xf32>
    %cst_17 = arith.constant dense<0.000000e+00> : vector<16xf32>
    %22 = vector.multi_reduction <add>, %21, %cst_17 [1] : vector<16x64xf32> to vector<16xf32>
    %23 = vector.shape_cast %22 : vector<16xf32> to vector<16x1xf32>
    %cst_18 = arith.constant 6.400000e+01 : f32
    %24 = vector.broadcast %cst_18 : f32 to vector<16x1xf32>
    %25 = arith.divf %23, %24 : vector<16x1xf32>
    %cst_19 = arith.constant 9.99999974E-6 : f32
    %26 = vector.broadcast %cst_19 : f32 to vector<16x1xf32>
    %27 = arith.addf %25, %26 : vector<16x1xf32>
    %28 = math.rsqrt %27 : vector<16x1xf32>
    %29 = vector.broadcast %28 : vector<16x1xf32> to vector<16x64xf32>
    %30 = arith.mulf %20, %29 : vector<16x64xf32>
    %31 = vector.broadcast %1 : vector<1x64xf32> to vector<16x64xf32>
    %32 = arith.mulf %30, %31 : vector<16x64xf32>
    %33 = vector.broadcast %2 : vector<1x64xf32> to vector<16x64xf32>
    %34 = arith.addf %32, %33 : vector<16x64xf32>
    %cst_20 = arith.constant 0.000000e+00 : f32
    %35 = vector.broadcast %cst_20 : f32 to vector<16x64xf32>
    %36 = arith.maximumf %34, %35 : vector<16x64xf32>
    %c0_21 = arith.constant 0 : index
    %c0_22 = arith.constant 0 : index
    %37 = vector.load %arg6[%c0_21, %c0_22] : memref<64x64xf32, #tpu.memory_space<vmem>>, vector<64x64xf32>
    %cst_23 = arith.constant dense<0.000000e+00> : vector<16x64xf32>
    %38 = tpu.matmul %36, %37, %cst_23 {dimension_numbers = #tpu.dot_dimension_numbers<[1], [0], [0], [1], [0, 0, 1, 1], [], []>} : vector<16x64xf32>, vector<64x64xf32>, vector<16x64xf32> -> vector<16x64xf32>
    %39 = vector.broadcast %3 : vector<1x64xf32> to vector<16x64xf32>
    %40 = arith.addf %38, %39 : vector<16x64xf32>
    %cst_24 = arith.constant dense<0.000000e+00> : vector<16xf32>
    %41 = vector.multi_reduction <add>, %40, %cst_24 [1] : vector<16x64xf32> to vector<16xf32>
    %42 = vector.shape_cast %41 : vector<16xf32> to vector<16x1xf32>
    %cst_25 = arith.constant 6.400000e+01 : f32
    %43 = vector.broadcast %cst_25 : f32 to vector<16x1xf32>
    %44 = arith.divf %42, %43 : vector<16x1xf32>
    %45 = vector.broadcast %44 : vector<16x1xf32> to vector<16x64xf32>
    %46 = arith.subf %40, %45 : vector<16x64xf32>
    %47 = arith.mulf %46, %46 : vector<16x64xf32>
    %cst_26 = arith.constant dense<0.000000e+00> : vector<16xf32>
    %48 = vector.multi_reduction <add>, %47, %cst_26 [1] : vector<16x64xf32> to vector<16xf32>
    %49 = vector.shape_cast %48 : vector<16xf32> to vector<16x1xf32>
    %cst_27 = arith.constant 6.400000e+01 : f32
    %50 = vector.broadcast %cst_27 : f32 to vector<16x1xf32>
    %51 = arith.divf %49, %50 : vector<16x1xf32>
    %cst_28 = arith.constant 9.99999974E-6 : f32
    %52 = vector.broadcast %cst_28 : f32 to vector<16x1xf32>
    %53 = arith.addf %51, %52 : vector<16x1xf32>
    %54 = math.rsqrt %53 : vector<16x1xf32>
    %55 = vector.broadcast %54 : vector<16x1xf32> to vector<16x64xf32>
    %56 = arith.mulf %46, %55 : vector<16x64xf32>
    %57 = vector.broadcast %4 : vector<1x64xf32> to vector<16x64xf32>
    %58 = arith.mulf %56, %57 : vector<16x64xf32>
    %59 = vector.broadcast %5 : vector<1x64xf32> to vector<16x64xf32>
    %60 = arith.addf %58, %59 : vector<16x64xf32>
    %cst_29 = arith.constant 0.000000e+00 : f32
    %61 = vector.broadcast %cst_29 : f32 to vector<16x64xf32>
    %62 = arith.maximumf %60, %61 : vector<16x64xf32>
    %c0_30 = arith.constant 0 : index
    %c0_31 = arith.constant 0 : index
    %63 = vector.load %arg7[%c0_30, %c0_31] : memref<64x60xf32, #tpu.memory_space<vmem>>, vector<64x60xf32>
    %cst_32 = arith.constant dense<0.000000e+00> : vector<16x60xf32>
    %64 = tpu.matmul %62, %63, %cst_32 {dimension_numbers = #tpu.dot_dimension_numbers<[1], [0], [0], [1], [0, 0, 1, 1], [], []>} : vector<16x64xf32>, vector<64x60xf32>, vector<16x60xf32> -> vector<16x60xf32>
    %c0_33 = arith.constant 0 : index
    %c0_34 = arith.constant 0 : index
    %65 = vector.load %arg8[%c0_33, %c0_34] : memref<1x60xf32, #tpu.memory_space<vmem>>, vector<1x60xf32>
    %66 = vector.broadcast %65 : vector<1x60xf32> to vector<16x60xf32>
    %67 = arith.addf %64, %66 : vector<16x60xf32>
    %c0_35 = arith.constant 0 : index
    %c0_36 = arith.constant 0 : index
    %68 = vector.load %arg9[%c0_35, %c0_36] : memref<16x60xf32, #tpu.memory_space<vmem>>, vector<16x60xf32>
    tpu.vector_store %arg9[%c0_35, %c0_36], %67 {strides = array<i32>} : memref<16x60xf32, #tpu.memory_space<vmem>>, vector<16x60xf32>,
    return
  }
  func.func @transform_0(%arg0: i32) -> (i32, i32) {
    %c0_i32 = arith.constant 0 : i32
    %c0_i32_0 = arith.constant 0 : i32
    return %arg0, %c0_i32 : i32, i32
  }
  func.func @transform_1(%arg0: i32) -> (i32, i32) {
    %c0_i32 = arith.constant 0 : i32
    %c0_i32_0 = arith.constant 0 : i32
    return %arg0, %c0_i32 : i32, i32
  }
  func.func @transform_2(%arg0: i32) -> (i32, i32) {
    %c0_i32 = arith.constant 0 : i32
    %c0_i32_0 = arith.constant 0 : i32
    %c0_i32_1 = arith.constant 0 : i32
    return %c0_i32, %c0_i32_0 : i32, i32
  }
  func.func @transform_3(%arg0: i32) -> (i32, i32) {
    %c0_i32 = arith.constant 0 : i32
    %c0_i32_0 = arith.constant 0 : i32
    %c0_i32_1 = arith.constant 0 : i32
    return %c0_i32, %c0_i32_0 : i32, i32
  }
  func.func @transform_4(%arg0: i32) -> (i32, i32) {
    %c0_i32 = arith.constant 0 : i32
    %c0_i32_0 = arith.constant 0 : i32
    %c0_i32_1 = arith.constant 0 : i32
    return %c0_i32, %c0_i32_0 : i32, i32
  }
  func.func @transform_5(%arg0: i32) -> (i32, i32) {
    %c0_i32 = arith.constant 0 : i32
    %c0_i32_0 = arith.constant 0 : i32
    %c0_i32_1 = arith.constant 0 : i32
    return %c0_i32, %c0_i32_0 : i32, i32
  }
  func.func @transform_6(%arg0: i32) -> (i32, i32) {
    %c0_i32 = arith.constant 0 : i32
    %c0_i32_0 = arith.constant 0 : i32
    %c0_i32_1 = arith.constant 0 : i32
    return %c0_i32, %c0_i32_0 : i32, i32
  }
  func.func @transform_7(%arg0: i32) -> (i32, i32) {
    %c0_i32 = arith.constant 0 : i32
    %c0_i32_0 = arith.constant 0 : i32
    %c0_i32_1 = arith.constant 0 : i32
    return %c0_i32, %c0_i32_0 : i32, i32
  }
  func.func @transform_8(%arg0: i32) -> (i32, i32) {
    %c0_i32 = arith.constant 0 : i32
    %c0_i32_0 = arith.constant 0 : i32
    return %arg0, %c0_i32 : i32, i32
  }
}

</mosaic_0001>

<llo_original>
// kernel: tpu_custom_call.1
$region0: #{tpu_custom_call.1}
  #allocation0 [shape = 'u32[]', space=smem, size = 0x4, offset = 0x4, fixed_abs, tag = 'smem constant byte address 0x4 - core index']
  #allocation1 [shape = 'u32[144,128]{1,0:T(1,128)}', space=vmem, size = 0x12000, scoped, tag = 'internal scratch']
  %s0 = inlined_call_operand.vmem [shape: f32[16,30], index: 0, kind: input, shape index: {}]
  %s1 = inlined_call_operand.vmem [shape: f32[16,2], index: 1, kind: input, shape index: {}]
  %s2 = inlined_call_operand.hbm [shape: f32[30,64], index: 2, kind: input, shape index: {}]
  %s3 = inlined_call_operand.hbm [shape: f32[2,64], index: 3, kind: input, shape index: {}]
  %s4 = inlined_call_operand.vmem [shape: f32[6,64], index: 4, kind: input, shape index: {}]
  %s5 = inlined_call_operand.hbm [shape: f32[64,64], index: 5, kind: input, shape index: {}]
  %s6 = inlined_call_operand.hbm [shape: f32[64,60], index: 6, kind: input, shape index: {}]
  %s7 = inlined_call_operand.vmem [shape: f32[1,60], index: 7, kind: input, shape index: {}]
  %s8 = inlined_call_operand.hbm [shape: f32[16,60], index: 8, kind: output, shape index: {}]
  %s9 = sld [smem:[#allocation0]]
  $region58: #{tpu_custom_call.1} parent=0
    _
  %s11 = ssub.s32 1, %s9
  %s12 = scalar_select 0, %s11, %s9
  $region1: #{tpu_custom_call.1} parent=0
    #allocation2 [shape = 'u8[16384]{0}', space=vmem, size = 0x4000, scoped, tag = 'input window, operand 2, single buffered']
    #allocation3 [shape = 's32[1]{0}', space=sflag, size = 0x4, scoped, tag = 'scoped memory for tpu_custom_call.1']
    #allocation4 [shape = 's32[1]{0}', space=sflag, size = 0x4, scoped, tag = 'scoped memory for tpu_custom_call.1']
    #allocation5 [shape = 'u8[1024]{0}', space=vmem, size = 0x400, scoped, tag = 'input window, operand 3, single buffered']
    #allocation6 [shape = 's32[1]{0}', space=sflag, size = 0x4, scoped, tag = 'scoped memory for tpu_custom_call.1']
    #allocation7 [shape = 'u8[32768]{0}', space=vmem, size = 0x8000, scoped, tag = 'input window, operand 5, single buffered']
    #allocation8 [shape = 'u8[32768]{0}', space=vmem, size = 0x8000, scoped, tag = 'input window, operand 6, single buffered']
    #allocation9 [shape = 's32[1]{0}', space=sflag, size = 0x4, scoped, tag = 'scoped memory for tpu_custom_call.1']
    #allocation10 [shape = 'u8[8192]{0}', space=vmem, size = 0x2000, scoped, tag = 'output window, operand 0, single buffered']
    %13 = vsyncpa [#allocation3], 0
    %14 = vsyncpa [#allocation6], 0
    %15 = vsyncpa [#allocation9], 0
    %16 = vsyncpa [#allocation4], 0
    // Predicated region
    $region2: #{tpu_custom_call.1} parent=1 // pred_check
      _
    $region3: #{tpu_custom_call.1} parent=1 // pred_check_branch
      %18 = sbr.rel (0) target = $region5
    $region4: #{tpu_custom_call.1} parent=1 // pred_region
      _
    $region5: #{tpu_custom_call.1} parent=1 // pred_fallthru
      _
    // Predicated region
    $region6: #{tpu_custom_call.1} parent=1 // pred_check
      _
    $region7: #{tpu_custom_call.1} parent=1 // pred_check_branch
      %20 = sbr.rel (0) target = $region9
    $region8: #{tpu_custom_call.1} parent=1 // pred_region
      _
    $region9: #{tpu_custom_call.1} parent=1 // pred_fallthru
      _
    // Predicated region
    $region10: #{tpu_custom_call.1} parent=1 // pred_check
      _
    $region11: #{tpu_custom_call.1} parent=1 // pred_check_branch
      %22 = sbr.rel (0) target = $region13
    $region12: #{tpu_custom_call.1} parent=1 // pred_region
      %s24 = ssub.s32 512, 512
      %25 = vsyncadd [#allocation3], %s24
      %s26 = sshll.u32 [#allocation2], 4
      %s27 = int_to_ptr.vmem [resolvable:$true] %s26
      %32 = dma.hbm_to_vmem [thread:$0]  %s2, 512, %s27, [#allocation3], 128, 128, 8
    $region13: #{tpu_custom_call.1} parent=1 // pred_fallthru
      _
    // Predicated region
    $region14: #{tpu_custom_call.1} parent=1 // pred_check
      _
    $region15: #{tpu_custom_call.1} parent=1 // pred_check_branch
      %34 = sbr.rel (0) target = $region17
    $region16: #{tpu_custom_call.1} parent=1 // pred_region
      %s36 = ssub.s32 32, 32
      %37 = vsyncadd [#allocation6], %s36
      %s39 = sshll.u32 [#allocation5], 4
      %s40 = int_to_ptr.vmem [resolvable:$true] %s39
      %42 = dma.hbm_to_vmem [thread:$0]  %s3, 32, %s40, [#allocation6]
    $region17: #{tpu_custom_call.1} parent=1 // pred_fallthru
      _
    // Predicated region
    $region18: #{tpu_custom_call.1} parent=1 // pred_check
      _
    $region19: #{tpu_custom_call.1} parent=1 // pred_check_branch
      %44 = sbr.rel (0) target = $region21
    $region20: #{tpu_custom_call.1} parent=1 // pred_region
      _
    $region21: #{tpu_custom_call.1} parent=1 // pred_fallthru
      _
    // Predicated region
    $region22: #{tpu_custom_call.1} parent=1 // pred_check
      _
    $region23: #{tpu_custom_call.1} parent=1 // pred_check_branch
      %46 = sbr.rel (0) target = $region25
    $region24: #{tpu_custom_call.1} parent=1 // pred_region
      %s48 = ssub.s32 1024, 1024
      %49 = vsyncadd [#allocation6], %s48
      %s50 = sshll.u32 [#allocation7], 4
      %s51 = int_to_ptr.vmem [resolvable:$true] %s50
      %56 = dma.hbm_to_vmem [thread:$0]  %s5, 1024, %s51, [#allocation6], 128, 128, 8
    $region25: #{tpu_custom_call.1} parent=1 // pred_fallthru
      _
    // Predicated region
    $region26: #{tpu_custom_call.1} parent=1 // pred_check
      _
    $region27: #{tpu_custom_call.1} parent=1 // pred_check_branch
      %58 = sbr.rel (0) target = $region29
    $region28: #{tpu_custom_call.1} parent=1 // pred_region
      %s60 = ssub.s32 1024, 1024
      %61 = vsyncadd [#allocation9], %s60
      %s62 = sshll.u32 [#allocation8], 4
      %s63 = int_to_ptr.vmem [resolvable:$true] %s62
      %68 = dma.hbm_to_vmem [thread:$0]  %s6, 1024, %s63, [#allocation9], 128, 128, 8
    $region29: #{tpu_custom_call.1} parent=1 // pred_fallthru
      _
    // Predicated region
    $region30: #{tpu_custom_call.1} parent=1 // pred_check
      _
    $region31: #{tpu_custom_call.1} parent=1 // pred_check_branch
      %70 = sbr.rel (0) target = $region33
    $region32: #{tpu_custom_call.1} parent=1 // pred_region
      _
    $region33: #{tpu_custom_call.1} parent=1 // pred_fallthru
      _
    // Predicated region
    $region34: #{tpu_custom_call.1} parent=1 // pred_check
      _
    $region35: #{tpu_custom_call.1} parent=1 // pred_check_branch
      %72 = sbr.rel (0) target = $region37
    $region36: #{tpu_custom_call.1} parent=1 // pred_region
      %73 = dma.done [#allocation3], 512
    $region37: #{tpu_custom_call.1} parent=1 // pred_fallthru
      _
    // Predicated region
    $region38: #{tpu_custom_call.1} parent=1 // pred_check
      _
    $region39: #{tpu_custom_call.1} parent=1 // pred_check_branch
      %75 = sbr.rel (0) target = $region41
    $region40: #{tpu_custom_call.1} parent=1 // pred_region
      %76 = dma.done [#allocation6], 32
    $region41: #{tpu_custom_call.1} parent=1 // pred_fallthru
      _
    // Predicated region
    $region42: #{tpu_custom_call.1} parent=1 // pred_check
      _
    $region43: #{tpu_custom_call.1} parent=1 // pred_check_branch
      %78 = sbr.rel (0) target = $region45
    $region44: #{tpu_custom_call.1} parent=1 // pred_region
      %79 = dma.done [#allocation6], 1024
    $region45: #{tpu_custom_call.1} parent=1 // pred_fallthru
      _
    // Predicated region
    $region46: #{tpu_custom_call.1} parent=1 // pred_check
      _
    $region47: #{tpu_custom_call.1} parent=1 // pred_check_branch
      %81 = sbr.rel (0) target = $region49
    $region48: #{tpu_custom_call.1} parent=1 // pred_region
      %82 = dma.done [#allocation9], 1024
    $region49: #{tpu_custom_call.1} parent=1 // pred_fallthru
      _
    %v83 = vld [vmem:[%s4] sm:$0x1]
    %v84 = vld [vmem:[%s4 + $0x1] sm:$0x1]
    %v85 = vld [vmem:[%s4 + $0x2] sm:$0x1]
    %v86 = vld [vmem:[%s4 + $0x3] sm:$0x1]
    %v87 = vld [vmem:[%s4 + $0x4] sm:$0x1]
    %v88 = vld [vmem:[%s4 + $0x5] sm:$0x1]
    %v89 = vld [vmem:[%s0] sm:$0xff]
    %v90 = vld [vmem:[%s0 + $0x8] sm:$0xff]
    %v91 = vld [vmem:[#allocation2] sm:$0xff]
    %v92 = vld [vmem:[#allocation2 + $0x8] sm:$0xff]
    %v93 = vld [vmem:[#allocation2 + $0x10] sm:$0xff]
    %v94 = vld [vmem:[#allocation2 + $0x18] sm:$0x3f]
    %v95 = vld [vmem:[%s1] sm:$0xff]
    %v96 = vld [vmem:[%s1 + $0x8] sm:$0xff]
    %v97 = vld [vmem:[#allocation5] sm:$0x3]
    %vm98 = vcmask 15360
    %v100 = vsel %vm98, %v95, 0
    %v103 = vsel %vm98, %v96, 0
    %vm105 = vcmask 1041408
    %v107 = vsel %vm105, %v97, 0
    %109 = vmatprep.subr.mxu0 0.0
    %110 = vmatpush1.msra.mxu0 0.0
    %111 = vmatprep.subr.mxu0 0.0
    %112 = vmatpush1.msra.mxu0 0.0
    %113 = vmatprep.subr.mxu0 0.0
    %114 = vmatpush1.msra.mxu0 0.0
    %115 = vmatprep.subr.mxu0 0.0
    %116 = vmatpush1.msra.mxu0 0.0
    %117 = vmatprep.subr.mxu0 0.0
    %118 = vmatpush1.msra.mxu0 0.0
    %119 = vmatprep.subr.mxu0 0.0
    %120 = vmatpush1.msra.mxu0 0.0
    %121 = vmatprep.subr.mxu0 0.0
    %122 = vmatpush1.msra.mxu0 0.0
    %123 = vmatprep.subr.mxu0 0.0
    %124 = vmatpush1.msra.mxu0 0.0
    %125 = vmatprep.subr.mxu0 0.0
    %126 = vmatpush1.msra.mxu0 0.0
    %127 = vmatprep.subr.mxu0 0.0
    %128 = vmatpush1.msra.mxu0 0.0
    %129 = vmatprep.subr.mxu0 0.0
    %130 = vmatpush1.msra.mxu0 0.0
    %131 = vmatprep.subr.mxu0 0.0
    %132 = vmatpush1.msra.mxu0 0.0
    %133 = vmatprep.subr.mxu0 0.0
    %134 = vmatpush1.msra.mxu0 0.0
    %135 = vmatprep.subr.mxu0 0.0
    %136 = vmatpush1.msra.mxu0 0.0
    %137 = vmatprep.subr.mxu0 0.0
    %138 = vmatpush1.msra.mxu0 0.0
    %139 = vmatprep.subr.mxu0 0.0
    %140 = vmatpush1.msra.mxu0 %v107
    %141 = vmatprep.subr.mxu0 0.0
    %142 = vmatpush2.msra.mxu0 0.0
    %143 = vmatprep.subr.mxu0 0.0
    %144 = vmatpush2.msra.mxu0 0.0
    %145 = vmatprep.subr.mxu0 0.0
    %146 = vmatpush2.msra.mxu0 0.0
    %147 = vmatprep.subr.mxu0 0.0
    %148 = vmatpush2.msra.mxu0 0.0
    %149 = vmatprep.subr.mxu0 0.0
    %150 = vmatpush2.msra.mxu0 0.0
    %151 = vmatprep.subr.mxu0 0.0
    %152 = vmatpush2.msra.mxu0 0.0
    %153 = vmatprep.subr.mxu0 0.0
    %154 = vmatpush2.msra.mxu0 0.0
    %155 = vmatprep.subr.mxu0 0.0
    %156 = vmatpush2.msra.mxu0 0.0
    %157 = vmatprep.subr.mxu0 0.0
    %158 = vmatpush2.msra.mxu0 0.0
    %159 = vmatprep.subr.mxu0 0.0
    %160 = vmatpush2.msra.mxu0 0.0
    %161 = vmatprep.subr.mxu0 0.0
    %162 = vmatpush2.msra.mxu0 0.0
    %163 = vmatprep.subr.mxu0 0.0
    %164 = vmatpush2.msra.mxu0 0.0
    %165 = vmatprep.subr.mxu0 0.0
    %166 = vmatpush2.msra.mxu0 0.0
    %167 = vmatprep.subr.mxu0 0.0
    %168 = vmatpush2.msra.mxu0 0.0
    %169 = vmatprep.subr.mxu0 0.0
    %170 = vmatpush2.msra.mxu0 0.0
    %171 = vmatprep.subr.mxu0 0.0
    %172 = vmatpush2.msra.mxu0 0.0
    %173 = vmatprep.mubr.f32.mxu0 0.0
    %174 = vmatmul.mubr.f32.gmra.mxu0 %v100
    %v175 = vpop.f32.mrf.mxu0
    %v176 = vadd.f32 0.0, %v175
    %v177 = vpop.f32.mrf.mxu0
    %178 = vmatprep.mubr.f32.mxu0 0.0
    %179 = vmatmul.mubr.f32.gmra.mxu0 %v103
    %v180 = vpop.f32.mrf.mxu0
    %v181 = vadd.f32 0.0, %v180
    %v182 = vpop.f32.mrf.mxu0
    %183 = vdwg.mxu0
    %vm184 = vcmask 244736
    %v186 = vsel %vm184, %v89, 0
    %v189 = vsel %vm184, %v90, 0
    %vm191 = vcmask 1045504
    %v193 = vsel %vm191, %v94, 0
    %195 = vmatprep.subr.mxu0 0.0
    %196 = vmatpush1.msra.mxu0 0.0
    %197 = vmatprep.subr.mxu0 0.0
    %198 = vmatpush1.msra.mxu0 0.0
    %199 = vmatprep.subr.mxu0 0.0
    %200 = vmatpush1.msra.mxu0 0.0
    %201 = vmatprep.subr.mxu0 0.0
    %202 = vmatpush1.msra.mxu0 0.0
    %203 = vmatprep.subr.mxu0 0.0
    %204 = vmatpush1.msra.mxu0 0.0
    %205 = vmatprep.subr.mxu0 0.0
    %206 = vmatpush1.msra.mxu0 0.0
    %207 = vmatprep.subr.mxu0 0.0
    %208 = vmatpush1.msra.mxu0 0.0
    %209 = vmatprep.subr.mxu0 0.0
    %210 = vmatpush1.msra.mxu0 0.0
    %211 = vmatprep.subr.mxu0 0.0
    %212 = vmatpush1.msra.mxu0 0.0
    %213 = vmatprep.subr.mxu0 0.0
    %214 = vmatpush1.msra.mxu0 0.0
    %215 = vmatprep.subr.mxu0 0.0
    %216 = vmatpush1.msra.mxu0 0.0
    %217 = vmatprep.subr.mxu0 0.0
    %218 = vmatpush1.msra.mxu0 0.0
    %219 = vmatprep.subr.mxu0 0.0
    %220 = vmatpush1.msra.mxu0 %v193
    %221 = vmatprep.subr.mxu0 0.0
    %222 = vmatpush1.msra.mxu0 %v93
    %223 = vmatprep.subr.mxu0 0.0
    %224 = vmatpush1.msra.mxu0 %v92
    %225 = vmatprep.subr.mxu0 0.0
    %226 = vmatpush1.msra.mxu0 %v91
    %227 = vmatprep.subr.mxu0 0.0
    %228 = vmatpush2.msra.mxu0 0.0
    %229 = vmatprep.subr.mxu0 0.0
    %230 = vmatpush2.msra.mxu0 0.0
    %231 = vmatprep.subr.mxu0 0.0
    %232 = vmatpush2.msra.mxu0 0.0
    %233 = vmatprep.subr.mxu0 0.0
    %234 = vmatpush2.msra.mxu0 0.0
    %235 = vmatprep.subr.mxu0 0.0
    %236 = vmatpush2.msra.mxu0 0.0
    %237 = vmatprep.subr.mxu0 0.0
    %238 = vmatpush2.msra.mxu0 0.0
    %239 = vmatprep.subr.mxu0 0.0
    %240 = vmatpush2.msra.mxu0 0.0
    %241 = vmatprep.subr.mxu0 0.0
    %242 = vmatpush2.msra.mxu0 0.0
    %243 = vmatprep.subr.mxu0 0.0
    %244 = vmatpush2.msra.mxu0 0.0
    %245 = vmatprep.subr.mxu0 0.0
    %246 = vmatpush2.msra.mxu0 0.0
    %247 = vmatprep.subr.mxu0 0.0
    %248 = vmatpush2.msra.mxu0 0.0
    %249 = vmatprep.subr.mxu0 0.0
    %250 = vmatpush2.msra.mxu0 0.0
    %251 = vmatprep.subr.mxu0 0.0
    %252 = vmatpush2.msra.mxu0 0.0
    %253 = vmatprep.subr.mxu0 0.0
    %254 = vmatpush2.msra.mxu0 0.0
    %255 = vmatprep.subr.mxu0 0.0
    %256 = vmatpush2.msra.mxu0 0.0
    %257 = vmatprep.subr.mxu0 0.0
    %258 = vmatpush2.msra.mxu0 0.0
    %259 = vmatprep.mubr.f32.mxu0 0.0
    %260 = vmatmul.mubr.f32.gmra.mxu0 %v186
    %v261 = vpop.f32.mrf.mxu0
    %v262 = vadd.f32 %v176, %v261
    %v263 = vpop.f32.mrf.mxu0
    %264 = vmatprep.mubr.f32.mxu0 0.0
    %265 = vmatmul.mubr.f32.gmra.mxu0 %v189
    %v266 = vpop.f32.mrf.mxu0
    %v267 = vadd.f32 %v181, %v266
    %v268 = vpop.f32.mrf.mxu0
    %269 = vdwg.mxu0
    %v270 = vlaneseq
    %v271 = vshrl.u32 %v270, 7
    %v272 = vsub.s32 0, %v271
    %v273 = vrot.slane %v83, %v272
    %v274 = vadd.f32 %v262, %v273
    %v275 = vadd.f32 %v267, %v273
    %vm276 = vcmask 523264
    %v277 = vsel %vm276, %v274, 0.0
    %278 = vadd.xlane.f32.xlu0 %v277
    %v279 = vpop.xlane.xlu0 %278
    %v280 = vsel %vm276, %v275, 0.0
    %281 = vadd.xlane.f32.xlu0 %v280
    %v282 = vpop.xlane.xlu0 %281
    %v283 = vrcp.pop 64.0
    %v284 = vmul.f32 %v279, %v283
    %v285 = vmul.f32 %v282, %v283
    %v286 = vsub.f32 %v274, %v284
    %v287 = vsub.f32 %v275, %v285
    %v288 = vmul.f32 %v286, %v286
    %v289 = vmul.f32 %v287, %v287
    %v290 = vsel %vm276, %v288, 0.0
    %291 = vadd.xlane.f32.xlu0 %v290
    %v292 = vpop.xlane.xlu0 %291
    %v293 = vsel %vm276, %v289, 0.0
    %294 = vadd.xlane.f32.xlu0 %v293
    %v295 = vpop.xlane.xlu0 %294
    %v296 = vmul.f32 %v292, %v283
    %v297 = vmul.f32 %v295, %v283
    %v298 = vadd.f32 %v296, 1e-05
    %v299 = vadd.f32 %v297, 1e-05
    %v300 = vrsqrt.pop %v298
    %v301 = vrsqrt.pop %v299
    %v302 = vmul.f32 %v286, %v300
    %v303 = vmul.f32 %v287, %v301
    %v304 = vlaneseq
    %v305 = vshrl.u32 %v304, 7
    %v306 = vsub.s32 0, %v305
    %v307 = vrot.slane %v84, %v306
    %v308 = vmul.f32 %v302, %v307
    %v309 = vmul.f32 %v303, %v307
    %v310 = vlaneseq
    %v311 = vshrl.u32 %v310, 7
    %v312 = vsub.s32 0, %v311
    %v313 = vrot.slane %v85, %v312
    %v314 = vadd.f32 %v308, %v313
    %v315 = vadd.f32 %v309, %v313
    %v316 = vmax.f32 %v314, 0.0
    %v317 = vmax.f32 %v315, 0.0
    %v318 = vld [vmem:[#allocation7] sm:$0xff]
    %v319 = vld [vmem:[#allocation7 + $0x8] sm:$0xff]
    %v320 = vld [vmem:[#allocation7 + $0x10] sm:$0xff]
    %v321 = vld [vmem:[#allocation7 + $0x18] sm:$0xff]
    %v322 = vld [vmem:[#allocation7 + $0x20] sm:$0xff]
    %v323 = vld [vmem:[#allocation7 + $0x28] sm:$0xff]
    %v324 = vld [vmem:[#allocation7 + $0x30] sm:$0xff]
    %v325 = vld [vmem:[#allocation7 + $0x38] sm:$0xff]
    %v326 = vlaneseq
    %v327 = vshrl.u32 %v326, 7
    %v328 = vsub.s32 0, %v327
    %v329 = vrot.slane %v86, %v328
    %v331 = vsel %vm276, %v316, 0
    %v334 = vsel %vm276, %v317, 0
    %336 = vmatprep.subr.mxu0 0.0
    %337 = vmatpush1.msra.mxu0 0.0
    %338 = vmatprep.subr.mxu0 0.0
    %339 = vmatpush1.msra.mxu0 0.0
    %340 = vmatprep.subr.mxu0 0.0
    %341 = vmatpush1.msra.mxu0 0.0
    %342 = vmatprep.subr.mxu0 0.0
    %343 = vmatpush1.msra.mxu0 0.0
    %344 = vmatprep.subr.mxu0 0.0
    %345 = vmatpush1.msra.mxu0 0.0
    %346 = vmatprep.subr.mxu0 0.0
    %347 = vmatpush1.msra.mxu0 0.0
    %348 = vmatprep.subr.mxu0 0.0
    %349 = vmatpush1.msra.mxu0 0.0
    %350 = vmatprep.subr.mxu0 0.0
    %351 = vmatpush1.msra.mxu0 0.0
    %352 = vmatprep.subr.mxu0 0.0
    %353 = vmatpush1.msra.mxu0 %v325
    %354 = vmatprep.subr.mxu0 0.0
    %355 = vmatpush1.msra.mxu0 %v324
    %356 = vmatprep.subr.mxu0 0.0
    %357 = vmatpush1.msra.mxu0 %v323
    %358 = vmatprep.subr.mxu0 0.0
    %359 = vmatpush1.msra.mxu0 %v322
    %360 = vmatprep.subr.mxu0 0.0
    %361 = vmatpush1.msra.mxu0 %v321
    %362 = vmatprep.subr.mxu0 0.0
    %363 = vmatpush1.msra.mxu0 %v320
    %364 = vmatprep.subr.mxu0 0.0
    %365 = vmatpush1.msra.mxu0 %v319
    %366 = vmatprep.subr.mxu0 0.0
    %367 = vmatpush1.msra.mxu0 %v318
    %368 = vmatprep.subr.mxu0 0.0
    %369 = vmatpush2.msra.mxu0 0.0
    %370 = vmatprep.subr.mxu0 0.0
    %371 = vmatpush2.msra.mxu0 0.0
    %372 = vmatprep.subr.mxu0 0.0
    %373 = vmatpush2.msra.mxu0 0.0
    %374 = vmatprep.subr.mxu0 0.0
    %375 = vmatpush2.msra.mxu0 0.0
    %376 = vmatprep.subr.mxu0 0.0
    %377 = vmatpush2.msra.mxu0 0.0
    %378 = vmatprep.subr.mxu0 0.0
    %379 = vmatpush2.msra.mxu0 0.0
    %380 = vmatprep.subr.mxu0 0.0
    %381 = vmatpush2.msra.mxu0 0.0
    %382 = vmatprep.subr.mxu0 0.0
    %383 = vmatpush2.msra.mxu0 0.0
    %384 = vmatprep.subr.mxu0 0.0
    %385 = vmatpush2.msra.mxu0 0.0
    %386 = vmatprep.subr.mxu0 0.0
    %387 = vmatpush2.msra.mxu0 0.0
    %388 = vmatprep.subr.mxu0 0.0
    %389 = vmatpush2.msra.mxu0 0.0
    %390 = vmatprep.subr.mxu0 0.0
    %391 = vmatpush2.msra.mxu0 0.0
    %392 = vmatprep.subr.mxu0 0.0
    %393 = vmatpush2.msra.mxu0 0.0
    %394 = vmatprep.subr.mxu0 0.0
    %395 = vmatpush2.msra.mxu0 0.0
    %396 = vmatprep.subr.mxu0 0.0
    %397 = vmatpush2.msra.mxu0 0.0
    %398 = vmatprep.subr.mxu0 0.0
    %399 = vmatpush2.msra.mxu0 0.0
    %400 = vmatprep.mubr.f32.mxu0 0.0
    %401 = vmatmul.mubr.f32.gmra.mxu0 %v331
    %v402 = vpop.f32.mrf.mxu0
    %v403 = vadd.f32 %v329, %v402
    %v404 = vpop.f32.mrf.mxu0
    %405 = vmatprep.mubr.f32.mxu0 0.0
    %406 = vmatmul.mubr.f32.gmra.mxu0 %v334
    %v407 = vpop.f32.mrf.mxu0
    %v408 = vadd.f32 %v329, %v407
    %v409 = vpop.f32.mrf.mxu0
    %410 = vdwg.mxu0
    %v411 = vsel %vm276, %v403, 0.0
    %412 = vadd.xlane.f32.xlu0 %v411
    %v413 = vpop.xlane.xlu0 %412
    %v414 = vsel %vm276, %v408, 0.0
    %415 = vadd.xlane.f32.xlu0 %v414
    %v416 = vpop.xlane.xlu0 %415
    %v417 = vmul.f32 %v413, %v283
    %v418 = vmul.f32 %v416, %v283
    %v419 = vsub.f32 %v403, %v417
    %v420 = vsub.f32 %v408, %v418
    %v421 = vmul.f32 %v419, %v419
    %v422 = vmul.f32 %v420, %v420
    %v423 = vsel %vm276, %v421, 0.0
    %424 = vadd.xlane.f32.xlu0 %v423
    %v425 = vpop.xlane.xlu0 %424
    %v426 = vsel %vm276, %v422, 0.0
    %427 = vadd.xlane.f32.xlu0 %v426
    %v428 = vpop.xlane.xlu0 %427
    %v429 = vmul.f32 %v425, %v283
    %v430 = vmul.f32 %v428, %v283
    %v431 = vadd.f32 %v429, 1e-05
    %v432 = vadd.f32 %v430, 1e-05
    %v433 = vrsqrt.pop %v431
    %v434 = vrsqrt.pop %v432
    %v435 = vmul.f32 %v419, %v433
    %v436 = vmul.f32 %v420, %v434
    %v437 = vlaneseq
    %v438 = vshrl.u32 %v437, 7
    %v439 = vsub.s32 0, %v438
    %v440 = vrot.slane %v87, %v439
    %v441 = vmul.f32 %v435, %v440
    %v442 = vmul.f32 %v436, %v440
    %v443 = vlaneseq
    %v444 = vshrl.u32 %v443, 7
    %v445 = vsub.s32 0, %v444
    %v446 = vrot.slane %v88, %v445
    %v447 = vadd.f32 %v441, %v446
    %v448 = vadd.f32 %v442, %v446
    %v449 = vmax.f32 %v447, 0.0
    %v450 = vmax.f32 %v448, 0.0
    %v451 = vld [vmem:[#allocation8] sm:$0xff]
    %v452 = vld [vmem:[#allocation8 + $0x8] sm:$0xff]
    %v453 = vld [vmem:[#allocation8 + $0x10] sm:$0xff]
    %v454 = vld [vmem:[#allocation8 + $0x18] sm:$0xff]
    %v455 = vld [vmem:[#allocation8 + $0x20] sm:$0xff]
    %v456 = vld [vmem:[#allocation8 + $0x28] sm:$0xff]
    %v457 = vld [vmem:[#allocation8 + $0x30] sm:$0xff]
    %v458 = vld [vmem:[#allocation8 + $0x38] sm:$0xff]
    %v459 = vld [vmem:[%s7] sm:$0x1]
    %v461 = vlaneseq
    %v462 = vshrl.u32 %v461, 7
    %v463 = vsub.s32 0, %v462
    %v464 = vrot.slane %v459, %v463
    %v467 = vsel %vm276, %v449, 0
    %v470 = vsel %vm276, %v450, 0
    %472 = vmatprep.subr.mxu0 0.0
    %473 = vmatpush1.msra.mxu0 0.0
    %474 = vmatprep.subr.mxu0 0.0
    %475 = vmatpush1.msra.mxu0 0.0
    %476 = vmatprep.subr.mxu0 0.0
    %477 = vmatpush1.msra.mxu0 0.0
    %478 = vmatprep.subr.mxu0 0.0
    %479 = vmatpush1.msra.mxu0 0.0
    %480 = vmatprep.subr.mxu0 0.0
    %481 = vmatpush1.msra.mxu0 0.0
    %482 = vmatprep.subr.mxu0 0.0
    %483 = vmatpush1.msra.mxu0 0.0
    %484 = vmatprep.subr.mxu0 0.0
    %485 = vmatpush1.msra.mxu0 0.0
    %486 = vmatprep.subr.mxu0 0.0
    %487 = vmatpush1.msra.mxu0 0.0
    %488 = vmatprep.subr.mxu0 0.0
    %489 = vmatpush1.msra.mxu0 %v458
    %490 = vmatprep.subr.mxu0 0.0
    %491 = vmatpush1.msra.mxu0 %v457
    %492 = vmatprep.subr.mxu0 0.0
    %493 = vmatpush1.msra.mxu0 %v456
    %494 = vmatprep.subr.mxu0 0.0
    %495 = vmatpush1.msra.mxu0 %v455
    %496 = vmatprep.subr.mxu0 0.0
    %497 = vmatpush1.msra.mxu0 %v454
    %498 = vmatprep.subr.mxu0 0.0
    %499 = vmatpush1.msra.mxu0 %v453
    %500 = vmatprep.subr.mxu0 0.0
    %501 = vmatpush1.msra.mxu0 %v452
    %502 = vmatprep.subr.mxu0 0.0
    %503 = vmatpush1.msra.mxu0 %v451
    %504 = vmatprep.subr.mxu0 0.0
    %505 = vmatpush2.msra.mxu0 0.0
    %506 = vmatprep.subr.mxu0 0.0
    %507 = vmatpush2.msra.mxu0 0.0
    %508 = vmatprep.subr.mxu0 0.0
    %509 = vmatpush2.msra.mxu0 0.0
    %510 = vmatprep.subr.mxu0 0.0
    %511 = vmatpush2.msra.mxu0 0.0
    %512 = vmatprep.subr.mxu0 0.0
    %513 = vmatpush2.msra.mxu0 0.0
    %514 = vmatprep.subr.mxu0 0.0
    %515 = vmatpush2.msra.mxu0 0.0
    %516 = vmatprep.subr.mxu0 0.0
    %517 = vmatpush2.msra.mxu0 0.0
    %518 = vmatprep.subr.mxu0 0.0
    %519 = vmatpush2.msra.mxu0 0.0
    %520 = vmatprep.subr.mxu0 0.0
    %521 = vmatpush2.msra.mxu0 0.0
    %522 = vmatprep.subr.mxu0 0.0
    %523 = vmatpush2.msra.mxu0 0.0
    %524 = vmatprep.subr.mxu0 0.0
    %525 = vmatpush2.msra.mxu0 0.0
    %526 = vmatprep.subr.mxu0 0.0
    %527 = vmatpush2.msra.mxu0 0.0
    %528 = vmatprep.subr.mxu0 0.0
    %529 = vmatpush2.msra.mxu0 0.0
    %530 = vmatprep.subr.mxu0 0.0
    %531 = vmatpush2.msra.mxu0 0.0
    %532 = vmatprep.subr.mxu0 0.0
    %533 = vmatpush2.msra.mxu0 0.0
    %534 = vmatprep.subr.mxu0 0.0
    %535 = vmatpush2.msra.mxu0 0.0
    %536 = vmatprep.mubr.f32.mxu0 0.0
    %537 = vmatmul.mubr.f32.gmra.mxu0 %v467
    %v538 = vpop.f32.mrf.mxu0
    %v539 = vadd.f32 %v464, %v538
    %v540 = vpop.f32.mrf.mxu0
    %541 = vmatprep.mubr.f32.mxu0 0.0
    %542 = vmatmul.mubr.f32.gmra.mxu0 %v470
    %v543 = vpop.f32.mrf.mxu0
    %v544 = vadd.f32 %v464, %v543
    %v545 = vpop.f32.mrf.mxu0
    %546 = vdwg.mxu0
    %vm547 = vcmask 490496
    %548 = vst.msk [vmem:[#allocation10] sm:$0xff] %vm547, %v539
    %549 = vst.msk [vmem:[#allocation10 + $0x8] sm:$0xff] %vm547, %v544
    // Predicated region
    $region50: #{tpu_custom_call.1} parent=1 // pred_check
      _
    $region51: #{tpu_custom_call.1} parent=1 // pred_check_branch
      %551 = sbr.rel (0) target = $region53
    $region52: #{tpu_custom_call.1} parent=1 // pred_region
      %s553 = ssub.s32 256, 256
      %554 = vsyncadd [#allocation4], %s553
      %s555 = sshll.u32 [#allocation10], 4
      %s556 = int_to_ptr.vmem [resolvable:$true] %s555
      %561 = dma.vmem_to_hbm [thread:$0]  %s556, 256, %s8, [#allocation4], 128, 128, 8
    $region53: #{tpu_custom_call.1} parent=1 // pred_fallthru
      _
    // Predicated region
    $region54: #{tpu_custom_call.1} parent=1 // pred_check
      _
    $region55: #{tpu_custom_call.1} parent=1 // pred_check_branch
      %563 = sbr.rel (0) target = $region57
    $region56: #{tpu_custom_call.1} parent=1 // pred_region
      %564 = dma.done [#allocation4], 256
    $region57: #{tpu_custom_call.1} parent=1 // pred_fallthru
      _
    %565 = vsyncpa [#allocation3], 1
    %566 = vsyncpa [#allocation6], 1
    %567 = vsyncpa [#allocation9], 1
    %568 = vsyncpa [#allocation4], 1

</llo_original>
